<compile_context>
chip_gen: v7x
topology: tpu7x:2x2x1
jax: 0.10.0
libtpu: 0.0.40
codegen_flags: <defaults>
</compile_context>

<pallas_src>
import functools

import jax
import jax.numpy as jnp
from jax.experimental import pallas as pl
from jax.experimental.pallas import tpu as pltpu

_BF16_SUBLANES = 16  # bf16 packs 16 rows per sublane tile


def _round_up(x, m):
    return (x + m - 1) // m * m


# -----------------------------------------------------------------------------
# Kernel
# -----------------------------------------------------------------------------
def actor_critic_kernel(x_ref, w_ref, out_ref, *, s_pad, h2, n_out):
    """Fused policy+value MLP: 3 matmuls over block-diagonal fused weights.

    Packed weight buffer layout (bf16, ncols = max(h2, n_out) lanes, every
    section starts on a 16-row boundary so slices are zero-cost views):
      rows [0, s_pad)                  : W1 (s_pad, h2) = [pw1 | vw1]
      rows [s_pad, s_pad+16)           : row 0 = b1, row 1 = b2, row 2 = b3,
                                         row 3 = tanh mask (1 on mean cols)
      rows [s_pad+16, s_pad+16+h2)     : W2 (h2, h2)   = blockdiag(pw2, vw2)
      rows [s_pad+16+h2, +h2)          : W3 (h2, n_out): pw3 -> cols 0:A,
                                                          vw3 -> col A
    """
    f32 = jnp.float32
    bf16 = jnp.bfloat16

    r_b = s_pad
    r_w2 = s_pad + 16
    r_w3 = r_w2 + h2

    x = x_ref[...]                                       # (tb, s_pad) bf16

    w1 = w_ref[0:s_pad, 0:h2]                            # (s_pad, h2)  bf16 view
    w2 = w_ref[r_w2:r_w2 + h2, 0:h2]                     # (h2, h2)     bf16 view
    w3 = w_ref[r_w3:r_w3 + h2, 0:n_out]                  # (h2, n_out)  bf16 view

    bias_blk = w_ref[r_b:r_b + 16, :].astype(f32)        # one aligned 16-row load
    b1 = bias_blk[0:1, 0:h2]
    b2 = bias_blk[1:2, 0:h2]
    b3 = bias_blk[2:3, 0:n_out]
    mask = bias_blk[3:4, 0:n_out]                        # 1.0 on policy-mean cols

    # Layer 1: [policy_h1 | value_h1]
    h = jnp.tanh(jnp.dot(x, w1, preferred_element_type=f32) + b1)
    # Layer 2: block-diagonal keeps the two nets independent
    h = jnp.tanh(jnp.dot(h.astype(bf16), w2, preferred_element_type=f32) + b2)
    # Layer 3: cols [0, A) = policy mean, col A = value, rest zero
    z = jnp.dot(h.astype(bf16), w3, preferred_element_type=f32) + b3

    # tanh-squash only the mean columns; value column passes through.
    out_ref[...] = (z + mask * (jnp.tanh(z) - z)).astype(out_ref.dtype)


# -----------------------------------------------------------------------------
# Parameter init (mimics torch.nn.Linear default) and offline fusion/packing
# -----------------------------------------------------------------------------
def init_params(key, state_dim, action_dim, hidden=64):
    """Per-layer f32 params, stored as (in_features, out_features)."""
    sizes_p = [state_dim, hidden, hidden, action_dim]
    sizes_v = [state_dim, hidden, hidden, 1]
    params = {}
    keys = jax.random.split(key, 12)
    k = 0
    for prefix, sizes in (("p", sizes_p), ("v", sizes_v)):
        for li in range(3):
            fan_in, fan_out = sizes[li], sizes[li + 1]
            bound = 1.0 / jnp.sqrt(fan_in)
            params[f"{prefix}w{li + 1}"] = jax.random.uniform(
                keys[k], (fan_in, fan_out), jnp.float32, -bound, bound)
            params[f"{prefix}b{li + 1}"] = jax.random.uniform(
                keys[k + 1], (1, fan_out), jnp.float32, -bound, bound)
            k += 2
    params["log_std"] = jnp.zeros((1, action_dim), jnp.float32)  # nn.Parameter(zeros)
    return params


def pack_params(params, state_dim, action_dim, hidden=64, dtype=jnp.bfloat16):
    """Fuse policy/value nets into block-diagonal weights, pack into one buffer.

    All sections are 16-row aligned so bf16 sublane tiles never straddle a
    section boundary inside the kernel.
    """
    h2 = 2 * hidden
    s_pad = _round_up(state_dim, 16)
    n_out = _round_up(action_dim + 1, 128)   # lane-dense output width
    ncols = max(h2, n_out)

    w1 = jnp.zeros((s_pad, ncols), jnp.float32)
    w1 = w1.at[:state_dim, :hidden].set(params["pw1"])
    w1 = w1.at[:state_dim, hidden:h2].set(params["vw1"])

    bias = jnp.zeros((16, ncols), jnp.float32)
    bias = bias.at[0, :hidden].set(params["pb1"].reshape(-1))
    bias = bias.at[0, hidden:h2].set(params["vb1"].reshape(-1))
    bias = bias.at[1, :hidden].set(params["pb2"].reshape(-1))
    bias = bias.at[1, hidden:h2].set(params["vb2"].reshape(-1))
    bias = bias.at[2, :action_dim].set(params["pb3"].reshape(-1))
    bias = bias.at[2, action_dim].set(params["vb3"].reshape(-1)[0])
    # row 3: tanh mask -> squash only the policy-mean columns (exact in bf16)
    bias = bias.at[3, :action_dim].set(1.0)

    w2 = jnp.zeros((h2, ncols), jnp.float32)
    w2 = w2.at[:hidden, :hidden].set(params["pw2"])
    w2 = w2.at[hidden:h2, hidden:h2].set(params["vw2"])

    w3 = jnp.zeros((h2, ncols), jnp.float32)
    w3 = w3.at[:hidden, :action_dim].set(params["pw3"])
    w3 = w3.at[hidden:h2, action_dim:action_dim + 1].set(params["vw3"])

    packed = jnp.concatenate([w1, bias, w2, w3], axis=0).astype(dtype)
    meta = dict(s_pad=s_pad, h2=h2, n_out=n_out, a_dim=action_dim,
                state_dim=state_dim)
    return packed, meta


# -----------------------------------------------------------------------------
# Wrapper
# -----------------------------------------------------------------------------
def mlp_actor_critic_forward(state, packed, log_std, meta, *, max_batch_tile=1024):
    """Returns (v, squashed_mean, scale) matching the torch forward."""
    B, S = state.shape
    s_pad, h2 = meta["s_pad"], meta["h2"]
    n_out, a_dim = meta["n_out"], meta["a_dim"]
    assert S == meta["state_dim"]

    # Batch tile: multiple of 16 (bf16 sublane pack); grid >= 2 whenever the
    # batch allows (keeps both v7x TensorCores busy, enables double-buffer
    # overlap); capped so per-tile VMEM stays small; batch padded to a
    # multiple of the tile (no giant single-block fallback).
    if B <= 2 * _BF16_SUBLANES:
        tb = _round_up(B, _BF16_SUBLANES)
    else:
        tb = min(max_batch_tile, _round_up(pl.cdiv(B, 2), _BF16_SUBLANES))
    b_pad = _round_up(B, tb)
    grid = (b_pad // tb,)

    # Cast + pad once in the wrapper: bf16 halves input DMA; zero pad rows /
    # cols are inert (extra W1 rows are zero, extra batch rows are sliced off).
    x = state.astype(jnp.bfloat16)
    x = jnp.pad(x, ((0, b_pad - B), (0, s_pad - S)))

    kernel = functools.partial(actor_critic_kernel, s_pad=s_pad, h2=h2, n_out=n_out)

    out = pl.pallas_call(
        kernel,
        out_shape=jax.ShapeDtypeStruct((b_pad, n_out), jnp.bfloat16),
        grid_spec=pltpu.PrefetchScalarGridSpec(
            num_scalar_prefetch=0,
            grid=grid,
            in_specs=[
                pl.BlockSpec((tb, s_pad), lambda i: (i, 0)),
                pl.BlockSpec(packed.shape, lambda i: (0, 0)),
            ],
            out_specs=pl.BlockSpec((tb, n_out), lambda i: (i, 0)),
        ),
        compiler_params=pltpu.CompilerParams(
            dimension_semantics=("parallel",),
            vmem_limit_bytes=32 * 1024 * 1024),
    )(x, packed)

    out = out[:B].astype(jnp.float32)
    squashed_mean = out[:, :a_dim]
    v = out[:, a_dim:a_dim + 1]
    # state-independent; stable softplus in plain XLA (matches torch F.softplus)
    scale = jax.nn.softplus(log_std.astype(jnp.float32)).reshape(a_dim)
    return v, squashed_mean, scale


# -----------------------------------------------------------------------------
if __name__ == "__main__":
    STATE_DIM, ACTION_DIM, HIDDEN = 16, 4, 64

    key = jax.random.PRNGKey(0)
    pkey, skey1, skey2 = jax.random.split(key, 3)
    params = init_params(pkey, STATE_DIM, ACTION_DIM, HIDDEN)
    packed, meta = pack_params(params, STATE_DIM, ACTION_DIM, HIDDEN)

    # unfused f32 JAX reference for cross-checking the fused bf16 kernel
    def ref_forward(x, p):
        hp = jnp.tanh(x @ p["pw1"] + p["pb1"])
        hp = jnp.tanh(hp @ p["pw2"] + p["pb2"])
        mean = jnp.tanh(hp @ p["pw3"] + p["pb3"])
        hv = jnp.tanh(x @ p["vw1"] + p["vb1"])
        hv = jnp.tanh(hv @ p["vw2"] + p["vb2"])
        vv = hv @ p["vw3"] + p["vb3"]
        return vv, mean

    # --- small batch (single block) ---------------------------------------
    B = 8
    state = jax.random.normal(skey1, (B, STATE_DIM), jnp.float32)
    v, squashed_mean, scale = mlp_actor_critic_forward(
        state, packed, params["log_std"], meta)
    jax.block_until_ready((v, squashed_mean, scale))

    assert v.shape == (B, 1)
    assert squashed_mean.shape == (B, ACTION_DIM)
    assert scale.shape == (ACTION_DIM,)
    # log_std is zeros -> softplus(0) == ln(2)
    assert jnp.allclose(scale, jnp.log(2.0), atol=1e-6)
    # squashed mean is tanh-bounded
    assert jnp.all(jnp.abs(squashed_mean) <= 1.0)

    v_ref, mean_ref = ref_forward(state, params)
    assert jnp.allclose(v, v_ref, atol=5e-2), float(jnp.max(jnp.abs(v - v_ref)))
    assert jnp.allclose(squashed_mean, mean_ref, atol=5e-2), float(
        jnp.max(jnp.abs(squashed_mean - mean_ref)))

    # --- non-divisible batch (exercises padding + grid >= 2 path) ----------
    B2 = 100
    state2 = jax.random.normal(skey2, (B2, STATE_DIM), jnp.float32)
    v2, mean2, _ = mlp_actor_critic_forward(
        state2, packed, params["log_std"], meta)
    jax.block_until_ready((v2, mean2))
    v2_ref, mean2_ref = ref_forward(state2, params)
    assert v2.shape == (B2, 1) and mean2.shape == (B2, ACTION_DIM)
    assert jnp.allclose(v2, v2_ref, atol=5e-2), float(jnp.max(jnp.abs(v2 - v2_ref)))
    assert jnp.allclose(mean2, mean2_ref, atol=5e-2), float(
        jnp.max(jnp.abs(mean2 - mean2_ref)))

    # TODO(synk): torch.distributions.Normal is represented by its parameters
    # (squashed_mean, scale); sampling/log_prob are left to the caller.
    print("KERNEL_OK")
</pallas_src>

<mosaic_0001>
module attributes {stable_mosaic.version = 11 : i64} {
  func.func @actor_critic_kernel(%arg0: i32, %arg1: memref<16x16xbf16, #tpu.memory_space<vmem>>, %arg2: memref<288x128xbf16, #tpu.memory_space<vmem>>, %arg3: memref<16x128xbf16, #tpu.memory_space<vmem>>) attributes {dimension_semantics = [#tpu.dimension_semantics<parallel>], iteration_bounds = array<i64: 1>, scalar_prefetch = 0 : i64, scratch_operands = 0 : i64, tpu.core_type = #tpu.core_type<tc>, window_params = [{transform_indices = @transform_0, window_bounds = array<i64: 16, 16>}, {pipeline_mode = #tpu.pipeline_mode<synchronous>, transform_indices = @transform_1, window_bounds = array<i64: 288, 128>}, {transform_indices = @transform_2, window_bounds = array<i64: 16, 128>}]} {
    %c0 = arith.constant 0 : index
    %c0_0 = arith.constant 0 : index
    %0 = vector.load %arg1[%c0, %c0_0] : memref<16x16xbf16, #tpu.memory_space<vmem>>, vector<16x16xbf16>
    %c0_1 = arith.constant 0 : index
    %c0_2 = arith.constant 0 : index
    %1 = vector.load %arg2[%c0_1, %c0_2] : memref<288x128xbf16, #tpu.memory_space<vmem>>, vector<16x128xbf16>
    %c32 = arith.constant 32 : index
    %c0_3 = arith.constant 0 : index
    %2 = vector.load %arg2[%c32, %c0_3] : memref<288x128xbf16, #tpu.memory_space<vmem>>, vector<128x128xbf16>
    %c160 = arith.constant 160 : index
    %c0_4 = arith.constant 0 : index
    %3 = vector.load %arg2[%c160, %c0_4] : memref<288x128xbf16, #tpu.memory_space<vmem>>, vector<128x128xbf16>
    %c16 = arith.constant 16 : index
    %c0_5 = arith.constant 0 : index
    %4 = vector.load %arg2[%c16, %c0_5] : memref<288x128xbf16, #tpu.memory_space<vmem>>, vector<16x128xbf16>
    %5 = arith.extf %4 : vector<16x128xbf16> to vector<16x128xf32>
    %6 = vector.extract_strided_slice %5 {offsets = [0, 0], sizes = [1, 128], strides = [1, 1]} : vector<16x128xf32> to vector<1x128xf32>
    %7 = vector.extract_strided_slice %5 {offsets = [1, 0], sizes = [1, 128], strides = [1, 1]} : vector<16x128xf32> to vector<1x128xf32>
    %8 = vector.extract_strided_slice %5 {offsets = [2, 0], sizes = [1, 128], strides = [1, 1]} : vector<16x128xf32> to vector<1x128xf32>
    %9 = vector.extract_strided_slice %5 {offsets = [3, 0], sizes = [1, 128], strides = [1, 1]} : vector<16x128xf32> to vector<1x128xf32>
    %cst = arith.constant dense<0.000000e+00> : vector<16x128xf32>
    %10 = tpu.matmul %0, %1, %cst {dimension_numbers = #tpu.dot_dimension_numbers<[1], [0], [0], [1], [0, 0, 1, 1], [], []>} : vector<16x16xbf16>, vector<16x128xbf16>, vector<16x128xf32> -> vector<16x128xf32>
    %11 = vector.broadcast %6 : vector<1x128xf32> to vector<16x128xf32>
    %12 = arith.addf %10, %11 : vector<16x128xf32>
    %13 = math.tanh %12 : vector<16x128xf32>
    %14 = arith.truncf %13 : vector<16x128xf32> to vector<16x128xbf16>
    %cst_6 = arith.constant dense<0.000000e+00> : vector<16x128xf32>
    %15 = tpu.matmul %14, %2, %cst_6 {dimension_numbers = #tpu.dot_dimension_numbers<[1], [0], [0], [1], [0, 0, 1, 1], [], []>} : vector<16x128xbf16>, vector<128x128xbf16>, vector<16x128xf32> -> vector<16x128xf32>
    %16 = vector.broadcast %7 : vector<1x128xf32> to vector<16x128xf32>
    %17 = arith.addf %15, %16 : vector<16x128xf32>
    %18 = math.tanh %17 : vector<16x128xf32>
    %19 = arith.truncf %18 : vector<16x128xf32> to vector<16x128xbf16>
    %cst_7 = arith.constant dense<0.000000e+00> : vector<16x128xf32>
    %20 = tpu.matmul %19, %3, %cst_7 {dimension_numbers = #tpu.dot_dimension_numbers<[1], [0], [0], [1], [0, 0, 1, 1], [], []>} : vector<16x128xbf16>, vector<128x128xbf16>, vector<16x128xf32> -> vector<16x128xf32>
    %21 = vector.broadcast %8 : vector<1x128xf32> to vector<16x128xf32>
    %22 = arith.addf %20, %21 : vector<16x128xf32>
    %23 = math.tanh %22 : vector<16x128xf32>
    %24 = arith.subf %23, %22 : vector<16x128xf32>
    %25 = vector.broadcast %9 : vector<1x128xf32> to vector<16x128xf32>
    %26 = arith.mulf %25, %24 : vector<16x128xf32>
    %27 = arith.addf %22, %26 : vector<16x128xf32>
    %28 = arith.truncf %27 : vector<16x128xf32> to vector<16x128xbf16>
    %c0_8 = arith.constant 0 : index
    %c0_9 = arith.constant 0 : index
    %29 = vector.load %arg3[%c0_8, %c0_9] : memref<16x128xbf16, #tpu.memory_space<vmem>>, vector<16x128xbf16>
    tpu.vector_store %arg3[%c0_8, %c0_9], %28 {strides = array<i32>} : memref<16x128xbf16, #tpu.memory_space<vmem>>, vector<16x128xbf16>,
    return
  }
  func.func @transform_0(%arg0: i32) -> (i32, i32) {
    %c0_i32 = arith.constant 0 : i32
    %c0_i32_0 = arith.constant 0 : i32
    return %arg0, %c0_i32 : i32, i32
  }
  func.func @transform_1(%arg0: i32) -> (i32, i32) {
    %c0_i32 = arith.constant 0 : i32
    %c0_i32_0 = arith.constant 0 : i32
    %c0_i32_1 = arith.constant 0 : i32
    return %c0_i32, %c0_i32_0 : i32, i32
  }
  func.func @transform_2(%arg0: i32) -> (i32, i32) {
    %c0_i32 = arith.constant 0 : i32
    %c0_i32_0 = arith.constant 0 : i32
    return %arg0, %c0_i32 : i32, i32
  }
}

</mosaic_0001>

<llo_original>
// kernel: tpu_custom_call.1
$region0: #{tpu_custom_call.1}
  #allocation0 [shape = 'u32[]', space=smem, size = 0x4, offset = 0x4, fixed_abs, tag = 'smem constant byte address 0x4 - core index']
  #allocation1 [shape = 'u32[144,128]{1,0:T(1,128)}', space=vmem, size = 0x12000, scoped, tag = 'internal scratch']
  %s0 = inlined_call_operand.hbm [shape: bf16[16,16], index: 0, kind: input, shape index: {}]
  %s1 = inlined_call_operand.hbm [shape: bf16[288,128], index: 1, kind: input, shape index: {}]
  %s2 = inlined_call_operand.hbm [shape: bf16[16,128], index: 2, kind: output, shape index: {}]
  %s3 = sld [smem:[#allocation0]]
  $region26: #{tpu_custom_call.1} parent=0
    _
  %s5 = ssub.s32 1, %s3
  %s6 = scalar_select 0, %s5, %s3
  $region1: #{tpu_custom_call.1} parent=0
    #allocation2 [shape = 'u8[4096]{0}', space=vmem, size = 0x1000, scoped, tag = 'input window, operand 0, single buffered']
    #allocation3 [shape = 's32[1]{0}', space=sflag, size = 0x4, scoped, tag = 'scoped memory for tpu_custom_call.1']
    #allocation4 [shape = 's32[1]{0}', space=sflag, size = 0x4, scoped, tag = 'scoped memory for tpu_custom_call.1']
    #allocation5 [shape = 'u8[73728]{0}', space=vmem, size = 0x12000, scoped, tag = 'input window, operand 1, single buffered']
    #allocation6 [shape = 's32[1]{0}', space=sflag, size = 0x4, scoped, tag = 'scoped memory for tpu_custom_call.1']
    #allocation7 [shape = 'u8[4096]{0}', space=vmem, size = 0x1000, scoped, tag = 'output window, operand 0, single buffered']
    %7 = vsyncpa [#allocation3], 0
    %8 = vsyncpa [#allocation6], 0
    %9 = vsyncpa [#allocation4], 0
    // Predicated region
    $region2: #{tpu_custom_call.1} parent=1 // pred_check
      _
    $region3: #{tpu_custom_call.1} parent=1 // pred_check_branch
      %11 = sbr.rel (0) target = $region5
    $region4: #{tpu_custom_call.1} parent=1 // pred_region
      %s13 = ssub.s32 128, 128
      %14 = vsyncadd [#allocation3], %s13
      %s15 = sshll.u32 [#allocation2], 4
      %s16 = int_to_ptr.vmem [resolvable:$true] %s15
      %21 = dma.hbm_to_vmem [thread:$0]  %s0, 128, %s16, [#allocation3], 64, 64, 4
    $region5: #{tpu_custom_call.1} parent=1 // pred_fallthru
      _
    // Predicated region
    $region6: #{tpu_custom_call.1} parent=1 // pred_check
      _
    $region7: #{tpu_custom_call.1} parent=1 // pred_check_branch
      %23 = sbr.rel (0) target = $region9
    $region8: #{tpu_custom_call.1} parent=1 // pred_region
      %s25 = ssub.s32 2304, 2304
      %26 = vsyncadd [#allocation6], %s25
      %s27 = sshll.u32 [#allocation5], 4
      %s28 = int_to_ptr.vmem [resolvable:$true] %s27
      %33 = dma.hbm_to_vmem [thread:$0]  %s1, 2304, %s28, [#allocation6], 64, 64, 4
    $region9: #{tpu_custom_call.1} parent=1 // pred_fallthru
      _
    // Predicated region
    $region10: #{tpu_custom_call.1} parent=1 // pred_check
      _
    $region11: #{tpu_custom_call.1} parent=1 // pred_check_branch
      %35 = sbr.rel (0) target = $region13
    $region12: #{tpu_custom_call.1} parent=1 // pred_region
      %36 = dma.done [#allocation3], 128
    $region13: #{tpu_custom_call.1} parent=1 // pred_fallthru
      _
    // Predicated region
    $region14: #{tpu_custom_call.1} parent=1 // pred_check
      _
    $region15: #{tpu_custom_call.1} parent=1 // pred_check_branch
      %38 = sbr.rel (0) target = $region17
    $region16: #{tpu_custom_call.1} parent=1 // pred_region
      %39 = dma.done [#allocation6], 2304
    $region17: #{tpu_custom_call.1} parent=1 // pred_fallthru
      _
    %v41 = vld [vmem:[#allocation2] sm:$0xf]
    %v42 = vld [vmem:[#allocation2 + $0x4] sm:$0xf]
    %v43 = vld [vmem:[#allocation5] sm:$0xf]
    %v44 = vld [vmem:[#allocation5 + $0x4] sm:$0xf]
    %v45 = vld [vmem:[#allocation5 + $0x10] sm:$0xf]
    %v46 = vld [vmem:[#allocation5 + $0x14] sm:$0xf]
    %v47 = vld [vmem:[#allocation5 + $0x18] sm:$0xf]
    %v48 = vld [vmem:[#allocation5 + $0x1c] sm:$0xf]
    %v49 = vld [vmem:[#allocation5 + $0x20] sm:$0xf]
    %v50 = vld [vmem:[#allocation5 + $0x24] sm:$0xf]
    %v51 = vld [vmem:[#allocation5 + $0x28] sm:$0xf]
    %v52 = vld [vmem:[#allocation5 + $0x2c] sm:$0xf]
    %v53 = vld [vmem:[#allocation5 + $0x30] sm:$0xf]
    %v54 = vld [vmem:[#allocation5 + $0x34] sm:$0xf]
    %v55 = vld [vmem:[#allocation5 + $0x38] sm:$0xf]
    %v56 = vld [vmem:[#allocation5 + $0x3c] sm:$0xf]
    %v57 = vld [vmem:[#allocation5 + $0x40] sm:$0xf]
    %v58 = vld [vmem:[#allocation5 + $0x44] sm:$0xf]
    %v59 = vld [vmem:[#allocation5 + $0x48] sm:$0xf]
    %v60 = vld [vmem:[#allocation5 + $0x4c] sm:$0xf]
    %v61 = vld [vmem:[#allocation5 + $0x50] sm:$0xf]
    %v62 = vld [vmem:[#allocation5 + $0x54] sm:$0xf]
    %v63 = vld [vmem:[#allocation5 + $0x58] sm:$0xf]
    %v64 = vld [vmem:[#allocation5 + $0x5c] sm:$0xf]
    %v65 = vld [vmem:[#allocation5 + $0x60] sm:$0xf]
    %v66 = vld [vmem:[#allocation5 + $0x64] sm:$0xf]
    %v67 = vld [vmem:[#allocation5 + $0x68] sm:$0xf]
    %v68 = vld [vmem:[#allocation5 + $0x6c] sm:$0xf]
    %v69 = vld [vmem:[#allocation5 + $0x70] sm:$0xf]
    %v70 = vld [vmem:[#allocation5 + $0x74] sm:$0xf]
    %v71 = vld [vmem:[#allocation5 + $0x78] sm:$0xf]
    %v72 = vld [vmem:[#allocation5 + $0x7c] sm:$0xf]
    %v73 = vld [vmem:[#allocation5 + $0x80] sm:$0xf]
    %v74 = vld [vmem:[#allocation5 + $0x84] sm:$0xf]
    %v75 = vld [vmem:[#allocation5 + $0x88] sm:$0xf]
    %v76 = vld [vmem:[#allocation5 + $0x8c] sm:$0xf]
    %v77 = vld [vmem:[#allocation5 + $0x8] sm:$0xf]
    %v78 = vunpack.c.l.bf16 %v77
    %v79 = vlaneseq
    %v80 = vshrl.u32 %v79, 7
    %v81 = vsub.s32 0, %v80
    %v82 = vrot.slane %v78, %v81
    %v85 = vunpack.c.l.b16 %v41
    %v86 = vunpack.c.l.b16 %v42
    %v87 = vpack.c.b16 %v86, %v85
    %v90 = vunpack.c.l.b16 %v43
    %v91 = vunpack.c.l.b16 %v44
    %v92 = vpack.c.b16 %v91, %v90
    %vm94 = vcmask 130048
    %v96 = vsel %vm94, %v87, 0
    %98 = vmatprep.subr.bf16.mxu0 0
    %99 = vmatpush1.bf16.msra.mxu0 %v92
    %100 = vmatprep.subr.bf16.mxu0 0
    %101 = vmatpush1.bf16.msra.mxu0 0
    %102 = vmatprep.subr.bf16.mxu0 0
    %103 = vmatpush1.bf16.msra.mxu0 0
    %104 = vmatprep.subr.bf16.mxu0 0
    %105 = vmatpush1.bf16.msra.mxu0 0
    %106 = vmatprep.subr.bf16.mxu0 0
    %107 = vmatpush1.bf16.msra.mxu0 0
    %108 = vmatprep.subr.bf16.mxu0 0
    %109 = vmatpush1.bf16.msra.mxu0 0
    %110 = vmatprep.subr.bf16.mxu0 0
    %111 = vmatpush1.bf16.msra.mxu0 0
    %112 = vmatprep.subr.bf16.mxu0 0
    %113 = vmatpush1.bf16.msra.mxu0 0
    %114 = vmatprep.subr.bf16.mxu0 0
    %115 = vmatpush1.bf16.msra.mxu0 0
    %116 = vmatprep.subr.bf16.mxu0 0
    %117 = vmatpush1.bf16.msra.mxu0 0
    %118 = vmatprep.subr.bf16.mxu0 0
    %119 = vmatpush1.bf16.msra.mxu0 0
    %120 = vmatprep.subr.bf16.mxu0 0
    %121 = vmatpush1.bf16.msra.mxu0 0
    %122 = vmatprep.subr.bf16.mxu0 0
    %123 = vmatpush1.bf16.msra.mxu0 0
    %124 = vmatprep.subr.bf16.mxu0 0
    %125 = vmatpush1.bf16.msra.mxu0 0
    %126 = vmatprep.subr.bf16.mxu0 0
    %127 = vmatpush1.bf16.msra.mxu0 0
    %128 = vmatprep.subr.bf16.mxu0 0
    %129 = vmatpush1.bf16.msra.mxu0 0
    %130 = vmatprep.mubr.bf16.mxu0 0
    %131 = vmatmul.mubr.bf16.gmra.mrb[0].mxu0 %v96
    %v132 = vpop.f32.mrb[0].mxu0
    %v133 = vadd.f32 %v82, %v132
    %v134 = vpop.f32.mrb[0].mxu0
    %v135 = vpop.f32.mrb[0].mxu0
    %v136 = vadd.f32 %v82, %v135
    %v137 = vpop.f32.mrb[0].mxu0
    %138 = vdwg.mxu0
    %v139 = vtanh.pop %v133
    %v140 = vtanh.pop %v136
    %v141 = vpack.c.bf16 %v140, %v139
    %v142 = vlaneseq
    %v143 = vshrl.u32 %v142, 7
    %v144 = vsub.s32 1, %v143
    %v145 = vrot.slane %v78, %v144
    %v162 = vunpack.c.l.b16 %v45
    %v163 = vunpack.c.l.b16 %v46
    %v164 = vunpack.c.l.b16 %v47
    %v165 = vunpack.c.l.b16 %v48
    %v166 = vunpack.c.l.b16 %v49
    %v167 = vunpack.c.l.b16 %v50
    %v168 = vunpack.c.l.b16 %v51
    %v169 = vunpack.c.l.b16 %v52
    %v170 = vunpack.c.l.b16 %v53
    %v171 = vunpack.c.l.b16 %v54
    %v172 = vunpack.c.l.b16 %v55
    %v173 = vunpack.c.l.b16 %v56
    %v174 = vunpack.c.l.b16 %v57
    %v175 = vunpack.c.l.b16 %v58
    %v176 = vunpack.c.l.b16 %v59
    %v177 = vunpack.c.l.b16 %v60
    %v178 = vpack.c.b16 %v163, %v162
    %v179 = vpack.c.b16 %v165, %v164
    %v180 = vpack.c.b16 %v167, %v166
    %v181 = vpack.c.b16 %v169, %v168
    %v182 = vpack.c.b16 %v171, %v170
    %v183 = vpack.c.b16 %v173, %v172
    %v184 = vpack.c.b16 %v175, %v174
    %v185 = vpack.c.b16 %v177, %v176
    %194 = vmatprep.subr.bf16.mxu0 0
    %195 = vmatpush1.bf16.msra.mxu0 %v178
    %196 = vmatprep.subr.bf16.mxu0 0
    %197 = vmatpush1.bf16.msra.mxu0 %v179
    %198 = vmatprep.subr.bf16.mxu0 0
    %199 = vmatpush1.bf16.msra.mxu0 %v180
    %200 = vmatprep.subr.bf16.mxu0 0
    %201 = vmatpush1.bf16.msra.mxu0 %v181
    %202 = vmatprep.subr.bf16.mxu0 0
    %203 = vmatpush1.bf16.msra.mxu0 %v182
    %204 = vmatprep.subr.bf16.mxu0 0
    %205 = vmatpush1.bf16.msra.mxu0 %v183
    %206 = vmatprep.subr.bf16.mxu0 0
    %207 = vmatpush1.bf16.msra.mxu0 %v184
    %208 = vmatprep.subr.bf16.mxu0 0
    %209 = vmatpush1.bf16.msra.mxu0 %v185
    %210 = vmatprep.subr.bf16.mxu0 0
    %211 = vmatpush1.bf16.msra.mxu0 0
    %212 = vmatprep.subr.bf16.mxu0 0
    %213 = vmatpush1.bf16.msra.mxu0 0
    %214 = vmatprep.subr.bf16.mxu0 0
    %215 = vmatpush1.bf16.msra.mxu0 0
    %216 = vmatprep.subr.bf16.mxu0 0
    %217 = vmatpush1.bf16.msra.mxu0 0
    %218 = vmatprep.subr.bf16.mxu0 0
    %219 = vmatpush1.bf16.msra.mxu0 0
    %220 = vmatprep.subr.bf16.mxu0 0
    %221 = vmatpush1.bf16.msra.mxu0 0
    %222 = vmatprep.subr.bf16.mxu0 0
    %223 = vmatpush1.bf16.msra.mxu0 0
    %224 = vmatprep.subr.bf16.mxu0 0
    %225 = vmatpush1.bf16.msra.mxu0 0
    %226 = vmatprep.mubr.bf16.mxu0 0
    %227 = vmatmul.mubr.bf16.gmra.mrb[0].mxu0 %v141
    %v228 = vpop.f32.mrb[0].mxu0
    %v229 = vadd.f32 %v145, %v228
    %v230 = vpop.f32.mrb[0].mxu0
    %v231 = vpop.f32.mrb[0].mxu0
    %v232 = vadd.f32 %v145, %v231
    %v233 = vpop.f32.mrb[0].mxu0
    %234 = vdwg.mxu0
    %v235 = vtanh.pop %v229
    %v236 = vtanh.pop %v232
    %v237 = vpack.c.bf16 %v236, %v235
    %v238 = vlaneseq
    %v239 = vshrl.u32 %v238, 7
    %v240 = vsub.s32 2, %v239
    %v241 = vrot.slane %v78, %v240
    %v258 = vunpack.c.l.b16 %v61
    %v259 = vunpack.c.l.b16 %v62
    %v260 = vunpack.c.l.b16 %v63
    %v261 = vunpack.c.l.b16 %v64
    %v262 = vunpack.c.l.b16 %v65
    %v263 = vunpack.c.l.b16 %v66
    %v264 = vunpack.c.l.b16 %v67
    %v265 = vunpack.c.l.b16 %v68
    %v266 = vunpack.c.l.b16 %v69
    %v267 = vunpack.c.l.b16 %v70
    %v268 = vunpack.c.l.b16 %v71
    %v269 = vunpack.c.l.b16 %v72
    %v270 = vunpack.c.l.b16 %v73
    %v271 = vunpack.c.l.b16 %v74
    %v272 = vunpack.c.l.b16 %v75
    %v273 = vunpack.c.l.b16 %v76
    %v274 = vpack.c.b16 %v259, %v258
    %v275 = vpack.c.b16 %v261, %v260
    %v276 = vpack.c.b16 %v263, %v262
    %v277 = vpack.c.b16 %v265, %v264
    %v278 = vpack.c.b16 %v267, %v266
    %v279 = vpack.c.b16 %v269, %v268
    %v280 = vpack.c.b16 %v271, %v270
    %v281 = vpack.c.b16 %v273, %v272
    %290 = vmatprep.subr.bf16.mxu0 0
    %291 = vmatpush1.bf16.msra.mxu0 %v274
    %292 = vmatprep.subr.bf16.mxu0 0
    %293 = vmatpush1.bf16.msra.mxu0 %v275
    %294 = vmatprep.subr.bf16.mxu0 0
    %295 = vmatpush1.bf16.msra.mxu0 %v276
    %296 = vmatprep.subr.bf16.mxu0 0
    %297 = vmatpush1.bf16.msra.mxu0 %v277
    %298 = vmatprep.subr.bf16.mxu0 0
    %299 = vmatpush1.bf16.msra.mxu0 %v278
    %300 = vmatprep.subr.bf16.mxu0 0
    %301 = vmatpush1.bf16.msra.mxu0 %v279
    %302 = vmatprep.subr.bf16.mxu0 0
    %303 = vmatpush1.bf16.msra.mxu0 %v280
    %304 = vmatprep.subr.bf16.mxu0 0
    %305 = vmatpush1.bf16.msra.mxu0 %v281
    %306 = vmatprep.subr.bf16.mxu0 0
    %307 = vmatpush1.bf16.msra.mxu0 0
    %308 = vmatprep.subr.bf16.mxu0 0
    %309 = vmatpush1.bf16.msra.mxu0 0
    %310 = vmatprep.subr.bf16.mxu0 0
    %311 = vmatpush1.bf16.msra.mxu0 0
    %312 = vmatprep.subr.bf16.mxu0 0
    %313 = vmatpush1.bf16.msra.mxu0 0
    %314 = vmatprep.subr.bf16.mxu0 0
    %315 = vmatpush1.bf16.msra.mxu0 0
    %316 = vmatprep.subr.bf16.mxu0 0
    %317 = vmatpush1.bf16.msra.mxu0 0
    %318 = vmatprep.subr.bf16.mxu0 0
    %319 = vmatpush1.bf16.msra.mxu0 0
    %320 = vmatprep.subr.bf16.mxu0 0
    %321 = vmatpush1.bf16.msra.mxu0 0
    %322 = vmatprep.mubr.bf16.mxu0 0
    %323 = vmatmul.mubr.bf16.gmra.mrb[0].mxu0 %v237
    %v324 = vpop.f32.mrb[0].mxu0
    %v325 = vadd.f32 %v241, %v324
    %v326 = vpop.f32.mrb[0].mxu0
    %v327 = vpop.f32.mrb[0].mxu0
    %v328 = vadd.f32 %v241, %v327
    %v329 = vpop.f32.mrb[0].mxu0
    %330 = vdwg.mxu0
    %v331 = vtanh.pop %v325
    %v332 = vtanh.pop %v328
    %v333 = vsub.f32 %v331, %v325
    %v334 = vsub.f32 %v332, %v328
    %v335 = vlaneseq
    %v336 = vshrl.u32 %v335, 7
    %v337 = vsub.s32 3, %v336
    %v338 = vrot.slane %v78, %v337
    %v339 = vmul.f32 %v338, %v333
    %v340 = vmul.f32 %v338, %v334
    %v341 = vadd.f32 %v325, %v339
    %v342 = vadd.f32 %v328, %v340
    %v343 = vpack.c.bf16 %v342, %v341
    %v345 = vunpack.c.l.b16 %v343
    %v346 = vunpack.c.h.b16 %v343
    %v347 = vpack.c.b16 %v345, %v345
    %v348 = vpack.c.b16 %v346, %v346
    %351 = vst [vmem:[#allocation7] sm:$0xf] %v347
    %352 = vst [vmem:[#allocation7 + $0x4] sm:$0xf] %v348
    // Predicated region
    $region18: #{tpu_custom_call.1} parent=1 // pred_check
      _
    $region19: #{tpu_custom_call.1} parent=1 // pred_check_branch
      %354 = sbr.rel (0) target = $region21
    $region20: #{tpu_custom_call.1} parent=1 // pred_region
      %s356 = ssub.s32 128, 128
      %357 = vsyncadd [#allocation4], %s356
      %s358 = sshll.u32 [#allocation7], 4
      %s359 = int_to_ptr.vmem [resolvable:$true] %s358
      %364 = dma.vmem_to_hbm [thread:$0]  %s359, 128, %s2, [#allocation4], 64, 64, 4
    $region21: #{tpu_custom_call.1} parent=1 // pred_fallthru
      _
    // Predicated region
    $region22: #{tpu_custom_call.1} parent=1 // pred_check
      _
    $region23: #{tpu_custom_call.1} parent=1 // pred_check_branch
      %366 = sbr.rel (0) target = $region25
    $region24: #{tpu_custom_call.1} parent=1 // pred_region
      %367 = dma.done [#allocation4], 128
    $region25: #{tpu_custom_call.1} parent=1 // pred_fallthru
      _
    %368 = vsyncpa [#allocation3], 1
    %369 = vsyncpa [#allocation6], 1
    %370 = vsyncpa [#allocation4], 1

</llo_original>
